<compile_context>
chip_gen: v7x
topology: tpu7x:2x2x1
jax: 0.10.0
libtpu: 0.0.40
codegen_flags: <defaults>
</compile_context>

<pallas_src>
import numpy as np
import jax
import jax.numpy as jnp
from jax.experimental import pallas as pl
from jax.experimental.pallas import tpu as pltpu

DEPTH = 3            # complete binary tree depth
NI = 7               # real internal nodes (heap layout 0..6)
NL = 8               # leaves
F = 16               # input features
R = 4                # number of elastic rules
N = 2048             # demo batch size (2 tiles -> both v7x TensorCores get work)
TN = 1024            # rows per grid step (multiple of 1024 so TN//8 is a 128-multiple)

NC = 16              # padded selector-column count (tree nodes 0..6, rules 8..11)
RULE_COL0 = 8        # rule slots start at selector column 8

# Row layout of the single consolidated constant block [CONST_ROWS, NC]:
W0 = 0               # rows  0..15 : transposed one-hot selector  w_T[c, f]
P0 = NC              # rows 16..31 : transposed path matrix       path_T[leaf, node] (+1/-1/0)
S0 = 2 * NC          # rows 32..47 : per-selector-column scalars, one scalar per COLUMN:
COL_THR = 0          #   thresholds (tree rows 0..6, rule rows 8..11)
COL_PLEN = 1         #   leaf reachability threshold (DEPTH-0.5 for real leaves, 1e9 pad)
COL_LEAF = 2         #   leaf class values (rows 0..7)
COL_SIGN = 3         #   rule comparison sign (rows 8..11)
COL_OVR = 4          #   rule override values (rows 8..11)
COL_MASK = 5         #   rule row mask (1.0 in rows 8..11)
COL_PRIO = 6         #   rule priority 1..R (later rule wins), rows 8..11
CONST_ROWS = 3 * NC  # 48


def edt_kernel(x_ref, c_ref, out_ref):
    tn = x_ref.shape[1]
    xv = x_ref[...]                                               # [F, TN]  lane-dense over rows

    # static slices of the single consolidated constant block
    w_t = c_ref[W0:W0 + NC, :]                                    # [NC, F]
    path_t = c_ref[P0:P0 + NC, :]                                 # [NC(leaf), NC(node)]
    thr = c_ref[S0:S0 + NC, COL_THR:COL_THR + 1]                  # [NC, 1]
    plen = c_ref[S0:S0 + NC, COL_PLEN:COL_PLEN + 1]
    leaf = c_ref[S0:S0 + NC, COL_LEAF:COL_LEAF + 1]
    sign = c_ref[S0:S0 + NC, COL_SIGN:COL_SIGN + 1]
    ovr = c_ref[S0:S0 + NC, COL_OVR:COL_OVR + 1]
    mask = c_ref[S0:S0 + NC, COL_MASK:COL_MASK + 1]
    prio = c_ref[S0:S0 + NC, COL_PRIO:COL_PRIO + 1]

    # --- fused one-hot feature selection (tree nodes rows 0..6, rules rows 8..11) ---
    vals = jnp.dot(w_t, xv, preferred_element_type=jnp.float32)   # [NC, TN]
    gt = vals > thr                                               # [NC, TN]

    # --- decision tree prediction --------------------------------------------------
    # sklearn convention: x[feat] <= thr -> left (-1), else right (+1)
    dirs = jnp.where(gt, 1.0, -1.0)                               # [NC, TN] f32
    # leaf reachability: score[l, n] = sum_j path_T[l, j] * dirs[j, n]
    score = jnp.dot(path_t, dirs, preferred_element_type=jnp.float32)   # [NC, TN]
    reached = score > plen                                        # reaches leaf iff score == DEPTH
    tree_pred = jnp.sum(jnp.where(reached, leaf, 0.0),
                        axis=0, keepdims=True)                    # [1, TN]

    # --- elastic rules: last matching rule overrides (distinct priorities) ---------
    cond = jnp.logical_and(gt == (sign > 0.0),                    # sign>0 -> x>thr else x<=thr
                           mask > 0.0)                            # only rule rows
    hit_prio = jnp.where(cond, prio, 0.0)                         # [NC, TN]
    best = jnp.max(hit_prio, axis=0, keepdims=True)               # [1, TN]
    sel = jnp.logical_and(cond, hit_prio == best)                 # exactly the last matching rule
    ovr_sel = jnp.sum(jnp.where(sel, ovr, 0.0),
                      axis=0, keepdims=True)                      # [1, TN]
    pred = jnp.where(best > 0.5, ovr_sel, tree_pred)              # [1, TN]

    # full-vreg, unmasked store: [1, TN] -> (1, 8, TN//8)
    out_ref[...] = pred.reshape(1, 8, tn // 8).astype(out_ref.dtype)


def elastic_decision_tree_forward(x, const_block, *, tn=TN):
    n, f = x.shape
    assert f == F
    assert tn % 1024 == 0, "tn must be a multiple of 1024 so tn//8 is a 128-multiple"
    g = pl.cdiv(n, tn)
    n_pad = g * tn
    if n_pad != n:
        x = jnp.pad(x, ((0, n_pad - n), (0, 0)))
    xt = x.T                                                      # [F, n_pad] lane-dense layout

    flops = 2 * n_pad * NC * F + 2 * n_pad * NC * NC              # two tiny matmuls per row
    bytes_accessed = n_pad * F * 4 + n_pad * 4 + CONST_ROWS * NC * 4

    out = pl.pallas_call(
        edt_kernel,
        out_shape=jax.ShapeDtypeStruct((g, 8, tn // 8), jnp.float32),
        grid_spec=pltpu.PrefetchScalarGridSpec(
            num_scalar_prefetch=0,
            grid=(g,),
            in_specs=[
                pl.BlockSpec((F, tn), lambda i: (0, i)),            # transposed x tile
                pl.BlockSpec((CONST_ROWS, NC), lambda i: (0, 0)),   # one consolidated const block
            ],
            out_specs=pl.BlockSpec((1, 8, tn // 8), lambda i: (i, 0, 0)),
        ),
        compiler_params=pltpu.CompilerParams(
            dimension_semantics=("parallel",)),                     # row grid shards across v7x TCs
        cost_estimate=pl.CostEstimate(
            flops=flops, transcendentals=0, bytes_accessed=bytes_accessed),
    )(xt, const_block)
    return out.reshape(-1)[:n]


def build_params():
    # Deterministic synthetic decision tree (heap layout, nodes 0..6).
    feat = np.array([(3 * j + 1) % F for j in range(NI)], dtype=np.int32)
    thr = np.array([0.15 * (j - 3) for j in range(NI)], dtype=np.float32)
    leaf_vals = np.array([float(l % 3) for l in range(NL)], dtype=np.float32)

    # Deterministic synthetic elastic rules: (feature, threshold, sign, override)
    #   sign > 0  -> condition is x[:, feat] >  thr
    #   sign <= 0 -> condition is x[:, feat] <= thr
    rule_feats = np.array([2, 5, 9, 13], dtype=np.int32)
    rule_thrs = np.array([1.0, -1.2, 0.8, -0.5], dtype=np.float32)
    rule_signs = np.array([1.0, -1.0, 1.0, -1.0], dtype=np.float32)
    rule_ovrs = np.array([5.0, 7.0, 3.0, 9.0], dtype=np.float32)
    rule_prios = np.arange(1, R + 1, dtype=np.float32)
    # "last matching rule wins" relies on distinct priorities
    assert len(set(rule_prios.tolist())) == R

    const = np.zeros((CONST_ROWS, NC), np.float32)

    # transposed one-hot selector: w_T[c, f] = 1 if selector column c reads feature f
    for j in range(NI):
        const[W0 + j, feat[j]] = 1.0
    for r in range(R):
        const[W0 + RULE_COL0 + r, rule_feats[r]] = 1.0

    # transposed path matrix: path_T[leaf, node] = +1 right / -1 left / 0 off-path
    for l in range(NL):
        bits = [(l >> 2) & 1, (l >> 1) & 1, l & 1]
        node = 0
        for d in range(DEPTH):
            const[P0 + l, node] = 1.0 if bits[d] else -1.0
            node = 2 * node + 1 + bits[d]

    # per-selector-column scalars stored as COLUMNS of the [NC, NC] scalar block
    const[S0:S0 + NI, COL_THR] = thr
    const[S0 + RULE_COL0:S0 + RULE_COL0 + R, COL_THR] = rule_thrs
    const[S0:S0 + NC, COL_PLEN] = 1e9                    # padded leaf rows never reached
    const[S0:S0 + NL, COL_PLEN] = DEPTH - 0.5            # robust "score == DEPTH" test
    const[S0:S0 + NL, COL_LEAF] = leaf_vals
    const[S0 + RULE_COL0:S0 + RULE_COL0 + R, COL_SIGN] = rule_signs
    const[S0 + RULE_COL0:S0 + RULE_COL0 + R, COL_OVR] = rule_ovrs
    const[S0 + RULE_COL0:S0 + RULE_COL0 + R, COL_MASK] = 1.0
    const[S0 + RULE_COL0:S0 + RULE_COL0 + R, COL_PRIO] = rule_prios

    raw = (feat, thr, leaf_vals, rule_feats, rule_thrs, rule_signs, rule_ovrs)
    return jnp.asarray(const), raw


def ref_forward(x, raw):
    feat, thr, leaf_vals, rule_feats, rule_thrs, rule_signs, rule_ovrs = raw
    feat = jnp.asarray(feat)
    thr = jnp.asarray(thr)
    leaf_vals = jnp.asarray(leaf_vals)
    n = x.shape[0]
    node = jnp.zeros((n,), jnp.int32)
    for _ in range(DEPTH):
        f = feat[node]
        t = thr[node]
        go_right = (x[jnp.arange(n), f] > t).astype(jnp.int32)
        node = 2 * node + 1 + go_right
    pred = leaf_vals[node - NI]
    for rf, rt, rs, ro in zip(rule_feats, rule_thrs, rule_signs, rule_ovrs):
        c = (x[:, rf] > rt) if rs > 0 else (x[:, rf] <= rt)
        pred = jnp.where(c, ro, pred)
    return pred


if __name__ == "__main__":
    key = jax.random.PRNGKey(0)
    x = jax.random.normal(key, (N, F), dtype=jnp.float32)

    const_block, raw = build_params()
    out = elastic_decision_tree_forward(x, const_block)
    out = jax.block_until_ready(out)

    ref = jax.block_until_ready(ref_forward(x, raw))
    assert out.shape == (N,) and out.dtype == jnp.float32
    np.testing.assert_allclose(np.asarray(out), np.asarray(ref), rtol=0, atol=0)
    print("KERNEL_OK")
</pallas_src>

<mosaic_0001>
module attributes {stable_mosaic.version = 11 : i64} {
  func.func @edt_kernel(%arg0: i32, %arg1: memref<16x1024xf32, #tpu.memory_space<vmem>>, %arg2: memref<48x16xf32, #tpu.memory_space<vmem>>, %arg3: memref<1x8x128xf32, #tpu.memory_space<vmem>>) attributes {dimension_semantics = [#tpu.dimension_semantics<parallel>], iteration_bounds = array<i64: 2>, scalar_prefetch = 0 : i64, scratch_operands = 0 : i64, tpu.core_type = #tpu.core_type<tc>, window_params = [{transform_indices = @transform_0, window_bounds = array<i64: 16, 1024>}, {pipeline_mode = #tpu.pipeline_mode<synchronous>, transform_indices = @transform_1, window_bounds = array<i64: 48, 16>}, {transform_indices = @transform_2, window_bounds = array<i64: 1, 8, 128>}]} {
    %c0 = arith.constant 0 : index
    %c0_0 = arith.constant 0 : index
    %0 = vector.load %arg1[%c0, %c0_0] : memref<16x1024xf32, #tpu.memory_space<vmem>>, vector<16x1024xf32>
    %c0_1 = arith.constant 0 : index
    %c0_2 = arith.constant 0 : index
    %1 = vector.load %arg2[%c0_1, %c0_2] : memref<48x16xf32, #tpu.memory_space<vmem>>, vector<16x16xf32>
    %c16 = arith.constant 16 : index
    %c0_3 = arith.constant 0 : index
    %2 = vector.load %arg2[%c16, %c0_3] : memref<48x16xf32, #tpu.memory_space<vmem>>, vector<16x16xf32>
    %c32 = arith.constant 32 : index
    %c0_4 = arith.constant 0 : index
    %3 = vector.load %arg2[%c32, %c0_4] : memref<48x16xf32, #tpu.memory_space<vmem>>, vector<16x1xf32>
    %c32_5 = arith.constant 32 : index
    %c1 = arith.constant 1 : index
    %4 = vector.load %arg2[%c32_5, %c1] : memref<48x16xf32, #tpu.memory_space<vmem>>, vector<16x1xf32>
    %c32_6 = arith.constant 32 : index
    %c2 = arith.constant 2 : index
    %5 = vector.load %arg2[%c32_6, %c2] : memref<48x16xf32, #tpu.memory_space<vmem>>, vector<16x1xf32>
    %c32_7 = arith.constant 32 : index
    %c3 = arith.constant 3 : index
    %6 = vector.load %arg2[%c32_7, %c3] : memref<48x16xf32, #tpu.memory_space<vmem>>, vector<16x1xf32>
    %c32_8 = arith.constant 32 : index
    %c4 = arith.constant 4 : index
    %7 = vector.load %arg2[%c32_8, %c4] : memref<48x16xf32, #tpu.memory_space<vmem>>, vector<16x1xf32>
    %c32_9 = arith.constant 32 : index
    %c5 = arith.constant 5 : index
    %8 = vector.load %arg2[%c32_9, %c5] : memref<48x16xf32, #tpu.memory_space<vmem>>, vector<16x1xf32>
    %c32_10 = arith.constant 32 : index
    %c6 = arith.constant 6 : index
    %9 = vector.load %arg2[%c32_10, %c6] : memref<48x16xf32, #tpu.memory_space<vmem>>, vector<16x1xf32>
    %cst = arith.constant dense<0.000000e+00> : vector<16x1024xf32>
    %10 = tpu.matmul %1, %0, %cst {dimension_numbers = #tpu.dot_dimension_numbers<[1], [0], [0], [1], [0, 0, 1, 1], [], []>} : vector<16x16xf32>, vector<16x1024xf32>, vector<16x1024xf32> -> vector<16x1024xf32>
    %11 = vector.broadcast %3 : vector<16x1xf32> to vector<16x1024xf32>
    %12 = arith.cmpf ogt, %10, %11 : vector<16x1024xf32>
    %cst_11 = arith.constant 1.000000e+00 : f32
    %cst_12 = arith.constant -1.000000e+00 : f32
    %13 = vector.broadcast %cst_11 : f32 to vector<16x1024xf32>
    %14 = vector.broadcast %cst_12 : f32 to vector<16x1024xf32>
    %15 = arith.select %12, %13, %14 : vector<16x1024xi1>, vector<16x1024xf32>
    %cst_13 = arith.constant dense<0.000000e+00> : vector<16x1024xf32>
    %16 = tpu.matmul %2, %15, %cst_13 {dimension_numbers = #tpu.dot_dimension_numbers<[1], [0], [0], [1], [0, 0, 1, 1], [], []>} : vector<16x16xf32>, vector<16x1024xf32>, vector<16x1024xf32> -> vector<16x1024xf32>
    %17 = vector.broadcast %4 : vector<16x1xf32> to vector<16x1024xf32>
    %18 = arith.cmpf ogt, %16, %17 : vector<16x1024xf32>
    %cst_14 = arith.constant 0.000000e+00 : f32
    %19 = vector.shape_cast %5 : vector<16x1xf32> to vector<16x1xf32>
    %20 = vector.broadcast %19 : vector<16x1xf32> to vector<16x1024xf32>
    %21 = vector.broadcast %cst_14 : f32 to vector<16x1024xf32>
    %22 = arith.select %18, %20, %21 : vector<16x1024xi1>, vector<16x1024xf32>
    %cst_15 = arith.constant dense<0.000000e+00> : vector<1024xf32>
    %23 = vector.multi_reduction <add>, %22, %cst_15 [0] : vector<16x1024xf32> to vector<1024xf32>
    %24 = vector.shape_cast %23 : vector<1024xf32> to vector<1x1024xf32>
    %cst_16 = arith.constant 0.000000e+00 : f32
    %25 = vector.broadcast %cst_16 : f32 to vector<16x1xf32>
    %26 = arith.cmpf ogt, %6, %25 : vector<16x1xf32>
    %27 = vector.broadcast %26 : vector<16x1xi1> to vector<16x1024xi1>
    %28 = vector.broadcast %27 : vector<16x1024xi1> to vector<16x1024xi1>
    %29 = arith.xori %12, %28 : vector<16x1024xi1>
    %cst_17 = arith.constant dense<true> : vector<16x1024xi1>
    %30 = arith.xori %29, %cst_17 : vector<16x1024xi1>
    %cst_18 = arith.constant 0.000000e+00 : f32
    %31 = vector.broadcast %cst_18 : f32 to vector<16x1xf32>
    %32 = arith.cmpf ogt, %8, %31 : vector<16x1xf32>
    %33 = vector.broadcast %32 : vector<16x1xi1> to vector<16x1024xi1>
    %34 = arith.andi %30, %33 : vector<16x1024xi1>
    %cst_19 = arith.constant 0.000000e+00 : f32
    %35 = vector.shape_cast %9 : vector<16x1xf32> to vector<16x1xf32>
    %36 = vector.broadcast %35 : vector<16x1xf32> to vector<16x1024xf32>
    %37 = vector.broadcast %cst_19 : f32 to vector<16x1024xf32>
    %38 = arith.select %34, %36, %37 : vector<16x1024xi1>, vector<16x1024xf32>
    %cst_20 = arith.constant dense<0xFF800000> : vector<1024xf32>
    %39 = vector.multi_reduction <maximumf>, %38, %cst_20 [0] : vector<16x1024xf32> to vector<1024xf32>
    %40 = vector.shape_cast %39 : vector<1024xf32> to vector<1x1024xf32>
    %41 = vector.broadcast %40 : vector<1x1024xf32> to vector<16x1024xf32>
    %42 = arith.cmpf oeq, %38, %41 : vector<16x1024xf32>
    %43 = arith.andi %34, %42 : vector<16x1024xi1>
    %cst_21 = arith.constant 0.000000e+00 : f32
    %44 = vector.shape_cast %7 : vector<16x1xf32> to vector<16x1xf32>
    %45 = vector.broadcast %44 : vector<16x1xf32> to vector<16x1024xf32>
    %46 = vector.broadcast %cst_21 : f32 to vector<16x1024xf32>
    %47 = arith.select %43, %45, %46 : vector<16x1024xi1>, vector<16x1024xf32>
    %cst_22 = arith.constant dense<0.000000e+00> : vector<1024xf32>
    %48 = vector.multi_reduction <add>, %47, %cst_22 [0] : vector<16x1024xf32> to vector<1024xf32>
    %49 = vector.shape_cast %48 : vector<1024xf32> to vector<1x1024xf32>
    %cst_23 = arith.constant 5.000000e-01 : f32
    %50 = vector.broadcast %cst_23 : f32 to vector<1x1024xf32>
    %51 = arith.cmpf ogt, %40, %50 : vector<1x1024xf32>
    %52 = arith.select %51, %49, %24 : vector<1x1024xi1>, vector<1x1024xf32>
    %53 = vector.shape_cast %52 : vector<1x1024xf32> to vector<1x8x128xf32>
    %c0_24 = arith.constant 0 : index
    %c0_25 = arith.constant 0 : index
    %c0_26 = arith.constant 0 : index
    %54 = vector.load %arg3[%c0_24, %c0_25, %c0_26] : memref<1x8x128xf32, #tpu.memory_space<vmem>>, vector<1x8x128xf32>
    tpu.vector_store %arg3[%c0_24, %c0_25, %c0_26], %53 {strides = array<i32>} : memref<1x8x128xf32, #tpu.memory_space<vmem>>, vector<1x8x128xf32>,
    return
  }
  func.func @transform_0(%arg0: i32) -> (i32, i32) {
    %c0_i32 = arith.constant 0 : i32
    %c0_i32_0 = arith.constant 0 : i32
    return %c0_i32, %arg0 : i32, i32
  }
  func.func @transform_1(%arg0: i32) -> (i32, i32) {
    %c0_i32 = arith.constant 0 : i32
    %c0_i32_0 = arith.constant 0 : i32
    %c0_i32_1 = arith.constant 0 : i32
    return %c0_i32, %c0_i32_0 : i32, i32
  }
  func.func @transform_2(%arg0: i32) -> (i32, i32, i32) {
    %c0_i32 = arith.constant 0 : i32
    %c0_i32_0 = arith.constant 0 : i32
    %c0_i32_1 = arith.constant 0 : i32
    return %arg0, %c0_i32, %c0_i32_0 : i32, i32, i32
  }
}

</mosaic_0001>

<llo_original>
// kernel: tpu_custom_call.1
$region0: #{tpu_custom_call.1}
  #allocation0 [shape = 'u32[]', space=smem, size = 0x4, offset = 0x4, fixed_abs, tag = 'smem constant byte address 0x4 - core index']
  #allocation1 [shape = 'u32[144,128]{1,0:T(1,128)}', space=vmem, size = 0x12000, scoped, tag = 'internal scratch']
  %s0 = inlined_call_operand.hbm [shape: f32[16,2048], index: 0, kind: input, shape index: {}]
  %s1 = inlined_call_operand.vmem [shape: f32[48,16], index: 1, kind: input, shape index: {}]
  %s2 = inlined_call_operand.hbm [shape: f32[2,8,128], index: 2, kind: output, shape index: {}]
  %s3 = sld [smem:[#allocation0]]
  $region45: #{tpu_custom_call.1} parent=0
    _
  %s5 = ssub.s32 1, %s3
  %s6 = scalar_select 0, %s5, %s3
  $region1: #{tpu_custom_call.1} parent=0
    #allocation2 [shape = 'u8[131072]{0}', space=vmem, size = 0x20000, scoped, tag = 'input window, operand 0']
    #allocation3 [shape = 's32[2]{0}', space=sflag, size = 0x8, scoped, tag = 'scoped memory for tpu_custom_call.1']
    #allocation4 [shape = 's32[2]{0}', space=sflag, size = 0x8, scoped, tag = 'scoped memory for tpu_custom_call.1']
    #allocation5 [shape = 'u8[8192]{0}', space=vmem, size = 0x2000, scoped, tag = 'output window, operand 0']
    %7 = vsyncpa [#allocation3], 0
    %s8 = scalar_lea.sflag [#allocation3], 1
    %9 = vsyncpa %s8, 0
    %10 = vsyncpa [#allocation4], 0
    %s11 = scalar_lea.sflag [#allocation4], 1
    %12 = vsyncpa %s11, 0
    loop: start=0, step=1, limit=4
    $region2: #{tpu_custom_call.1} parent=1 // loop_pre_header
      _
    $region3: #{tpu_custom_call.1} parent=1 // loop_header
      %s14 = sphi 0, %s18
      %p15 = scmp.ge.s32.totalorder %s14, 4
      %s24 = sphi 0, %s26
      %s27 = sphi 0, %s24
      %s28 = sphi 0, %s27
      %s44 = sphi 0, %s28
      %s48 = sphi 0, %s48
      %s50 = sphi 0, %s48
      %s51 = sphi 0, %s50
      %s65 = sphi 0, %s51
      %s71 = sphi 0, %s73
      %s74 = sphi 0, %s71
      %s75 = sphi 0, %s74
      %s91 = sphi 0, %s75
    $region4: #{tpu_custom_call.1} parent=1 // loop_header_branch
      %17 = sbr.rel (%p15) target = $region8
    $region5: #{tpu_custom_call.1} parent=1 // loop_body
      %s19 = ssub.s32 %s14, 1
      %s20 = ssub.s32 %s14, 2
      %s21 = sadd.s32 %s14, 1
      %s22 = ssub.s32 %s14, %s21
      %p23 = scmp.eq.s32.totalorder %s22, 0
      %s25 = sadd.s32 %s24, 1
      %s26 = scalar_select %p23, %s24, %s25
      %p29 = pneg %p23
      %p30 = scmp.eq.s32.totalorder %s14, 1
      %p31 = por %p29, %p30
      %p32 = scmp.ne.s32.totalorder %s24, %s27
      %p33 = scmp.eq.s32.totalorder %s14, 0
      %p34 = por %p32, %p33
      %p35 = scmp.ne.s32.totalorder %s24, %s27
      %p36 = scmp.eq.s32.totalorder %s19, 1
      %p37 = por %p35, %p36
      %p38 = scmp.ne.s32.totalorder %s27, %s28
      %p39 = scmp.eq.s32.totalorder %s19, 0
      %p40 = por %p38, %p39
      %p41 = scmp.ne.s32.totalorder %s27, %s28
      %p42 = scmp.eq.s32.totalorder %s20, 1
      %p43 = por %p41, %p42
      %p45 = scmp.ne.s32.totalorder %s28, %s44
      %p46 = scmp.eq.s32.totalorder %s20, 0
      %p47 = por %p45, %p46
      %s49 = sadd.s32 %s48, 1
      %p52 = scmp.eq.s32.totalorder %s14, 1
      %p53 = scmp.ne.s32.totalorder %s48, %s50
      %p54 = scmp.eq.s32.totalorder %s14, 0
      %p55 = por %p53, %p54
      %p56 = scmp.ne.s32.totalorder %s48, %s50
      %p57 = scmp.eq.s32.totalorder %s19, 1
      %p58 = por %p56, %p57
      %p59 = scmp.ne.s32.totalorder %s50, %s51
      %p60 = scmp.eq.s32.totalorder %s19, 0
      %p61 = por %p59, %p60
      %p62 = scmp.ne.s32.totalorder %s50, %s51
      %p63 = scmp.eq.s32.totalorder %s20, 1
      %p64 = por %p62, %p63
      %p66 = scmp.ne.s32.totalorder %s51, %s65
      %p67 = scmp.eq.s32.totalorder %s20, 0
      %p68 = por %p66, %p67
      %s69 = ssub.s32 %s14, %s21
      %p70 = scmp.eq.s32.totalorder %s69, 0
      %s72 = sadd.s32 %s71, 1
      %s73 = scalar_select %p70, %s71, %s72
      %p76 = pneg %p70
      %p77 = scmp.eq.s32.totalorder %s14, 1
      %p78 = por %p76, %p77
      %p79 = scmp.ne.s32.totalorder %s71, %s74
      %p80 = scmp.eq.s32.totalorder %s14, 0
      %p81 = por %p79, %p80
      %p82 = scmp.ne.s32.totalorder %s71, %s74
      %p83 = scmp.eq.s32.totalorder %s19, 1
      %p84 = por %p82, %p83
      %p85 = scmp.ne.s32.totalorder %s74, %s75
      %p86 = scmp.eq.s32.totalorder %s19, 0
      %p87 = por %p85, %p86
      %p88 = scmp.ne.s32.totalorder %s74, %s75
      %p89 = scmp.eq.s32.totalorder %s20, 1
      %p90 = por %p88, %p89
      %p92 = scmp.ne.s32.totalorder %s75, %s91
      %p93 = scmp.eq.s32.totalorder %s20, 0
      %p94 = por %p92, %p93
      %p95 = scmp.le.s32.totalorder 1, %s14
      %p96 = scmp.lt.s32.totalorder %s14, 3
      %p97 = pnand %p95, %p96
      %p98 = pneg %p97
      // Predicated region
      $region9: #{tpu_custom_call.1} parent=5 // pred_check
        _
      $region10: #{tpu_custom_call.1} parent=5 // pred_check_branch
        %100 = sbr.rel (%p97) target = $region12
      $region11: #{tpu_custom_call.1} parent=5 // pred_region
        %s101 = ssub.s32 %s14, 1
        // Predicated region
        $region13: #{tpu_custom_call.1} parent=11 // pred_check
          %p102 = pneg %p61
        $region14: #{tpu_custom_call.1} parent=11 // pred_check_branch
          %104 = sbr.rel (%p102) target = $region16
        $region15: #{tpu_custom_call.1} parent=11 // pred_region
          _
        $region16: #{tpu_custom_call.1} parent=11 // pred_fallthru
          _
      $region12: #{tpu_custom_call.1} parent=5 // pred_fallthru
        _
      %p105 = scmp.lt.s32.totalorder %s14, 2
      // Predicated region
      $region17: #{tpu_custom_call.1} parent=5 // pred_check
        %p106 = pneg %p105
      $region18: #{tpu_custom_call.1} parent=5 // pred_check_branch
        %108 = sbr.rel (%p106) target = $region20
      $region19: #{tpu_custom_call.1} parent=5 // pred_region
        // Predicated region
        $region21: #{tpu_custom_call.1} parent=19 // pred_check
          %p109 = pneg %p34
        $region22: #{tpu_custom_call.1} parent=19 // pred_check_branch
          %111 = sbr.rel (%p109) target = $region24
        $region23: #{tpu_custom_call.1} parent=19 // pred_region
          %s112 = sand.u32 %s24, 1
          %s113 = scalar_lea.sflag [#allocation3], %s112
          %s114 = sand.u32 %s24, 1
          %s115 = smul.addr %s114, 128
          %s116 = scalar_lea.vmem [#allocation2], %s115
          %s117 = smul.u32 8, %s14
          %s119 = ssub.s32 2048, 2048
          %120 = vsyncadd %s113, %s119
          %s121 = smul.addr %s117, 128
          %s122 = scalar_lea.hbm %s0, %s121
          %s123 = sshll.u32 %s116, 4
          %s124 = int_to_ptr.vmem [resolvable:$true] %s123
          %129 = dma.hbm_to_vmem [thread:$0]  %s122, 2048, %s124, %s113, 2048, 1024, 64
        $region24: #{tpu_custom_call.1} parent=19 // pred_fallthru
          _
      $region20: #{tpu_custom_call.1} parent=5 // pred_fallthru
        _
      %p130 = scmp.le.s32.totalorder 1, %s14
      %p131 = scmp.lt.s32.totalorder %s14, 3
      %p132 = pnand %p130, %p131
      %p133 = pneg %p132
      // Predicated region
      $region25: #{tpu_custom_call.1} parent=5 // pred_check
        _
      $region26: #{tpu_custom_call.1} parent=5 // pred_check_branch
        %135 = sbr.rel (%p132) target = $region28
      $region27: #{tpu_custom_call.1} parent=5 // pred_region
        %s136 = ssub.s32 %s14, 1
        %s137 = sand.u32 %s27, 1
        %s138 = scalar_lea.sflag [#allocation3], %s137
        %s139 = sand.u32 %s27, 1
        %s140 = smul.addr %s139, 128
        %s141 = scalar_lea.vmem [#allocation2], %s140
        // Predicated region
        $region29: #{tpu_custom_call.1} parent=27 // pred_check
          %p142 = pneg %p40
        $region30: #{tpu_custom_call.1} parent=27 // pred_check_branch
          %144 = sbr.rel (%p142) target = $region32
        $region31: #{tpu_custom_call.1} parent=27 // pred_region
          %145 = dma.done %s138, 2048
        $region32: #{tpu_custom_call.1} parent=27 // pred_fallthru
          _
        %s146 = sand.u32 %s27, 1
        %s147 = scalar_lea.sflag [#allocation3], %s146
        %s148 = sand.u32 %s27, 1
        %s149 = smul.addr %s148, 128
        %s150 = scalar_lea.vmem [#allocation2], %s149
        %p151 = pneg %p40
        %p152 = pneg %p37
        %p153 = pneg %p61
        %p154 = pneg %p58
        %p155 = pneg %p87
        %p156 = pneg %p84
        %s157 = sand.u32 %s74, 1
        %s158 = scalar_lea.sflag [#allocation4], %s157
        %s159 = sand.u32 %s74, 1
        %s160 = smul.addr %s159, 8
        %s161 = scalar_lea.vmem [#allocation5], %s160
        %s162 = smul.u32 8, %s19
        %v163 = vld [vmem:[%s141] sm:$0xff]
        %v164 = vld [vmem:[%s141 + $0x8] sm:$0xff]
        %v165 = vld [vmem:[%s141 + $0x10] sm:$0xff]
        %v166 = vld [vmem:[%s141 + $0x18] sm:$0xff]
        %v167 = vld [vmem:[%s141 + $0x20] sm:$0xff]
        %v168 = vld [vmem:[%s141 + $0x28] sm:$0xff]
        %v169 = vld [vmem:[%s141 + $0x30] sm:$0xff]
        %v170 = vld [vmem:[%s141 + $0x38] sm:$0xff]
        %v171 = vld [vmem:[%s141 + $0x40] sm:$0xff]
        %v172 = vld [vmem:[%s141 + $0x48] sm:$0xff]
        %v173 = vld [vmem:[%s141 + $0x50] sm:$0xff]
        %v174 = vld [vmem:[%s141 + $0x58] sm:$0xff]
        %v175 = vld [vmem:[%s141 + $0x60] sm:$0xff]
        %v176 = vld [vmem:[%s141 + $0x68] sm:$0xff]
        %v177 = vld [vmem:[%s141 + $0x70] sm:$0xff]
        %v178 = vld [vmem:[%s141 + $0x78] sm:$0xff]
        %v179 = vld [vmem:[%s1] sm:$0xff]
        %v180 = vld [vmem:[%s1 + $0x8] sm:$0xff]
        %v181 = vld [vmem:[%s1 + $0x10] sm:$0xff]
        %v182 = vld [vmem:[%s1 + $0x18] sm:$0xff]
        %v183 = vld [vmem:[%s1 + $0x20] sm:$0xff]
        %v184 = vld [vmem:[%s1 + $0x28] sm:$0xff]
        %vm185 = vcmask 130048
        %v187 = vsel %vm185, %v179, 0
        %v190 = vsel %vm185, %v180, 0
        %192 = vmatprep.subr.mxu0 %v164
        %193 = vmatpush1.msra.mxu0 %v163
        %194 = vmatprep.subr.mxu0 %v172
        %195 = vmatpush1.msra.mxu0 %v171
        %196 = vmatprep.subr.mxu0 0.0
        %197 = vmatpush1.msra.mxu0 0.0
        %198 = vmatprep.subr.mxu0 0.0
        %199 = vmatpush1.msra.mxu0 0.0
        %200 = vmatprep.subr.mxu0 0.0
        %201 = vmatpush1.msra.mxu0 0.0
        %202 = vmatprep.subr.mxu0 0.0
        %203 = vmatpush1.msra.mxu0 0.0
        %204 = vmatprep.subr.mxu0 0.0
        %205 = vmatpush1.msra.mxu0 0.0
        %206 = vmatprep.subr.mxu0 0.0
        %207 = vmatpush1.msra.mxu0 0.0
        %208 = vmatprep.subr.mxu0 0.0
        %209 = vmatpush1.msra.mxu0 0.0
        %210 = vmatprep.subr.mxu0 0.0
        %211 = vmatpush1.msra.mxu0 0.0
        %212 = vmatprep.subr.mxu0 0.0
        %213 = vmatpush1.msra.mxu0 0.0
        %214 = vmatprep.subr.mxu0 0.0
        %215 = vmatpush1.msra.mxu0 0.0
        %216 = vmatprep.subr.mxu0 0.0
        %217 = vmatpush1.msra.mxu0 0.0
        %218 = vmatprep.subr.mxu0 0.0
        %219 = vmatpush1.msra.mxu0 0.0
        %220 = vmatprep.subr.mxu0 0.0
        %221 = vmatpush1.msra.mxu0 0.0
        %222 = vmatprep.subr.mxu0 0.0
        %223 = vmatpush1.msra.mxu0 0.0
        %224 = vmatprep.subr.mxu0 0.0
        %225 = vmatpush1.msra.mxu0 0.0
        %226 = vmatprep.subr.mxu0 0.0
        %227 = vmatpush1.msra.mxu0 0.0
        %228 = vmatprep.subr.mxu0 0.0
        %229 = vmatpush1.msra.mxu0 0.0
        %230 = vmatprep.subr.mxu0 0.0
        %231 = vmatpush1.msra.mxu0 0.0
        %232 = vmatprep.subr.mxu0 0.0
        %233 = vmatpush1.msra.mxu0 0.0
        %234 = vmatprep.subr.mxu0 0.0
        %235 = vmatpush1.msra.mxu0 0.0
        %236 = vmatprep.subr.mxu0 0.0
        %237 = vmatpush1.msra.mxu0 0.0
        %238 = vmatprep.subr.mxu0 0.0
        %239 = vmatpush1.msra.mxu0 0.0
        %240 = vmatprep.subr.mxu0 0.0
        %241 = vmatpush1.msra.mxu0 0.0
        %242 = vmatprep.subr.mxu0 0.0
        %243 = vmatpush1.msra.mxu0 0.0
        %244 = vmatprep.subr.mxu0 0.0
        %245 = vmatpush1.msra.mxu0 0.0
        %246 = vmatprep.subr.mxu0 0.0
        %247 = vmatpush1.msra.mxu0 0.0
        %248 = vmatprep.subr.mxu0 0.0
        %249 = vmatpush1.msra.mxu0 0.0
        %250 = vmatprep.subr.mxu0 0.0
        %251 = vmatpush1.msra.mxu0 0.0
        %252 = vmatprep.subr.mxu0 0.0
        %253 = vmatpush1.msra.mxu0 0.0
        %254 = vmatprep.subr.mxu0 0.0
        %255 = vmatpush1.msra.mxu0 0.0
        %256 = vmatprep.mubr.f32.mxu0 0.0
        %257 = vmatmul.mubr.f32.gmra.mrb[0].mxu0 %v187
        %v258 = vpop.f32.mrb[0].mxu0
        %v259 = vadd.f32 0.0, %v258
        %v260 = vpop.f32.mrb[0].mxu0
        %v261 = vadd.f32 0.0, %v260
        %262 = vmatprep.mubr.f32.mxu0 0.0
        %263 = vmatmul.mubr.f32.gmra.mrb[0].mxu0 %v190
        %v264 = vpop.f32.mrb[0].mxu0
        %v265 = vadd.f32 0.0, %v264
        %v266 = vpop.f32.mrb[0].mxu0
        %v267 = vadd.f32 0.0, %v266
        %268 = vdwg.mxu0
        %269 = vmatprep.subr.mxu0 %v166
        %270 = vmatpush1.msra.mxu0 %v165
        %271 = vmatprep.subr.mxu0 %v174
        %272 = vmatpush1.msra.mxu0 %v173
        %273 = vmatprep.subr.mxu0 0.0
        %274 = vmatpush1.msra.mxu0 0.0
        %275 = vmatprep.subr.mxu0 0.0
        %276 = vmatpush1.msra.mxu0 0.0
        %277 = vmatprep.subr.mxu0 0.0
        %278 = vmatpush1.msra.mxu0 0.0
        %279 = vmatprep.subr.mxu0 0.0
        %280 = vmatpush1.msra.mxu0 0.0
        %281 = vmatprep.subr.mxu0 0.0
        %282 = vmatpush1.msra.mxu0 0.0
        %283 = vmatprep.subr.mxu0 0.0
        %284 = vmatpush1.msra.mxu0 0.0
        %285 = vmatprep.subr.mxu0 0.0
        %286 = vmatpush1.msra.mxu0 0.0
        %287 = vmatprep.subr.mxu0 0.0
        %288 = vmatpush1.msra.mxu0 0.0
        %289 = vmatprep.subr.mxu0 0.0
        %290 = vmatpush1.msra.mxu0 0.0
        %291 = vmatprep.subr.mxu0 0.0
        %292 = vmatpush1.msra.mxu0 0.0
        %293 = vmatprep.subr.mxu0 0.0
        %294 = vmatpush1.msra.mxu0 0.0
        %295 = vmatprep.subr.mxu0 0.0
        %296 = vmatpush1.msra.mxu0 0.0
        %297 = vmatprep.subr.mxu0 0.0
        %298 = vmatpush1.msra.mxu0 0.0
        %299 = vmatprep.subr.mxu0 0.0
        %300 = vmatpush1.msra.mxu0 0.0
        %301 = vmatprep.subr.mxu0 0.0
        %302 = vmatpush1.msra.mxu0 0.0
        %303 = vmatprep.subr.mxu0 0.0
        %304 = vmatpush1.msra.mxu0 0.0
        %305 = vmatprep.subr.mxu0 0.0
        %306 = vmatpush1.msra.mxu0 0.0
        %307 = vmatprep.subr.mxu0 0.0
        %308 = vmatpush1.msra.mxu0 0.0
        %309 = vmatprep.subr.mxu0 0.0
        %310 = vmatpush1.msra.mxu0 0.0
        %311 = vmatprep.subr.mxu0 0.0
        %312 = vmatpush1.msra.mxu0 0.0
        %313 = vmatprep.subr.mxu0 0.0
        %314 = vmatpush1.msra.mxu0 0.0
        %315 = vmatprep.subr.mxu0 0.0
        %316 = vmatpush1.msra.mxu0 0.0
        %317 = vmatprep.subr.mxu0 0.0
        %318 = vmatpush1.msra.mxu0 0.0
        %319 = vmatprep.subr.mxu0 0.0
        %320 = vmatpush1.msra.mxu0 0.0
        %321 = vmatprep.subr.mxu0 0.0
        %322 = vmatpush1.msra.mxu0 0.0
        %323 = vmatprep.subr.mxu0 0.0
        %324 = vmatpush1.msra.mxu0 0.0
        %325 = vmatprep.subr.mxu0 0.0
        %326 = vmatpush1.msra.mxu0 0.0
        %327 = vmatprep.subr.mxu0 0.0
        %328 = vmatpush1.msra.mxu0 0.0
        %329 = vmatprep.subr.mxu0 0.0
        %330 = vmatpush1.msra.mxu0 0.0
        %331 = vmatprep.subr.mxu0 0.0
        %332 = vmatpush1.msra.mxu0 0.0
        %333 = vmatprep.mubr.f32.mxu0 0.0
        %334 = vmatmul.mubr.f32.gmra.mrb[0].mxu0 %v187
        %v335 = vpop.f32.mrb[0].mxu0
        %v336 = vadd.f32 0.0, %v335
        %v337 = vpop.f32.mrb[0].mxu0
        %v338 = vadd.f32 0.0, %v337
        %339 = vmatprep.mubr.f32.mxu0 0.0
        %340 = vmatmul.mubr.f32.gmra.mrb[0].mxu0 %v190
        %v341 = vpop.f32.mrb[0].mxu0
        %v342 = vadd.f32 0.0, %v341
        %v343 = vpop.f32.mrb[0].mxu0
        %v344 = vadd.f32 0.0, %v343
        %345 = vdwg.mxu0
        %346 = vmatprep.subr.mxu0 %v168
        %347 = vmatpush1.msra.mxu0 %v167
        %348 = vmatprep.subr.mxu0 %v176
        %349 = vmatpush1.msra.mxu0 %v175
        %350 = vmatprep.subr.mxu0 0.0
        %351 = vmatpush1.msra.mxu0 0.0
        %352 = vmatprep.subr.mxu0 0.0
        %353 = vmatpush1.msra.mxu0 0.0
        %354 = vmatprep.subr.mxu0 0.0
        %355 = vmatpush1.msra.mxu0 0.0
        %356 = vmatprep.subr.mxu0 0.0
        %357 = vmatpush1.msra.mxu0 0.0
        %358 = vmatprep.subr.mxu0 0.0
        %359 = vmatpush1.msra.mxu0 0.0
        %360 = vmatprep.subr.mxu0 0.0
        %361 = vmatpush1.msra.mxu0 0.0
        %362 = vmatprep.subr.mxu0 0.0
        %363 = vmatpush1.msra.mxu0 0.0
        %364 = vmatprep.subr.mxu0 0.0
        %365 = vmatpush1.msra.mxu0 0.0
        %366 = vmatprep.subr.mxu0 0.0
        %367 = vmatpush1.msra.mxu0 0.0
        %368 = vmatprep.subr.mxu0 0.0
        %369 = vmatpush1.msra.mxu0 0.0
        %370 = vmatprep.subr.mxu0 0.0
        %371 = vmatpush1.msra.mxu0 0.0
        %372 = vmatprep.subr.mxu0 0.0
        %373 = vmatpush1.msra.mxu0 0.0
        %374 = vmatprep.subr.mxu0 0.0
        %375 = vmatpush1.msra.mxu0 0.0
        %376 = vmatprep.subr.mxu0 0.0
        %377 = vmatpush1.msra.mxu0 0.0
        %378 = vmatprep.subr.mxu0 0.0
        %379 = vmatpush1.msra.mxu0 0.0
        %380 = vmatprep.subr.mxu0 0.0
        %381 = vmatpush1.msra.mxu0 0.0
        %382 = vmatprep.subr.mxu0 0.0
        %383 = vmatpush1.msra.mxu0 0.0
        %384 = vmatprep.subr.mxu0 0.0
        %385 = vmatpush1.msra.mxu0 0.0
        %386 = vmatprep.subr.mxu0 0.0
        %387 = vmatpush1.msra.mxu0 0.0
        %388 = vmatprep.subr.mxu0 0.0
        %389 = vmatpush1.msra.mxu0 0.0
        %390 = vmatprep.subr.mxu0 0.0
        %391 = vmatpush1.msra.mxu0 0.0
        %392 = vmatprep.subr.mxu0 0.0
        %393 = vmatpush1.msra.mxu0 0.0
        %394 = vmatprep.subr.mxu0 0.0
        %395 = vmatpush1.msra.mxu0 0.0
        %396 = vmatprep.subr.mxu0 0.0
        %397 = vmatpush1.msra.mxu0 0.0
        %398 = vmatprep.subr.mxu0 0.0
        %399 = vmatpush1.msra.mxu0 0.0
        %400 = vmatprep.subr.mxu0 0.0
        %401 = vmatpush1.msra.mxu0 0.0
        %402 = vmatprep.subr.mxu0 0.0
        %403 = vmatpush1.msra.mxu0 0.0
        %404 = vmatprep.subr.mxu0 0.0
        %405 = vmatpush1.msra.mxu0 0.0
        %406 = vmatprep.subr.mxu0 0.0
        %407 = vmatpush1.msra.mxu0 0.0
        %408 = vmatprep.subr.mxu0 0.0
        %409 = vmatpush1.msra.mxu0 0.0
        %410 = vmatprep.mubr.f32.mxu0 0.0
        %411 = vmatmul.mubr.f32.gmra.mrb[0].mxu0 %v187
        %v412 = vpop.f32.mrb[0].mxu0
        %v413 = vadd.f32 0.0, %v412
        %v414 = vpop.f32.mrb[0].mxu0
        %v415 = vadd.f32 0.0, %v414
        %416 = vmatprep.mubr.f32.mxu0 0.0
        %417 = vmatmul.mubr.f32.gmra.mrb[0].mxu0 %v190
        %v418 = vpop.f32.mrb[0].mxu0
        %v419 = vadd.f32 0.0, %v418
        %v420 = vpop.f32.mrb[0].mxu0
        %v421 = vadd.f32 0.0, %v420
        %422 = vdwg.mxu0
        %423 = vmatprep.subr.mxu0 %v170
        %424 = vmatpush1.msra.mxu0 %v169
        %425 = vmatprep.subr.mxu0 %v178
        %426 = vmatpush1.msra.mxu0 %v177
        %427 = vmatprep.subr.mxu0 0.0
        %428 = vmatpush1.msra.mxu0 0.0
        %429 = vmatprep.subr.mxu0 0.0
        %430 = vmatpush1.msra.mxu0 0.0
        %431 = vmatprep.subr.mxu0 0.0
        %432 = vmatpush1.msra.mxu0 0.0
        %433 = vmatprep.subr.mxu0 0.0
        %434 = vmatpush1.msra.mxu0 0.0
        %435 = vmatprep.subr.mxu0 0.0
        %436 = vmatpush1.msra.mxu0 0.0
        %437 = vmatprep.subr.mxu0 0.0
        %438 = vmatpush1.msra.mxu0 0.0
        %439 = vmatprep.subr.mxu0 0.0
        %440 = vmatpush1.msra.mxu0 0.0
        %441 = vmatprep.subr.mxu0 0.0
        %442 = vmatpush1.msra.mxu0 0.0
        %443 = vmatprep.subr.mxu0 0.0
        %444 = vmatpush1.msra.mxu0 0.0
        %445 = vmatprep.subr.mxu0 0.0
        %446 = vmatpush1.msra.mxu0 0.0
        %447 = vmatprep.subr.mxu0 0.0
        %448 = vmatpush1.msra.mxu0 0.0
        %449 = vmatprep.subr.mxu0 0.0
        %450 = vmatpush1.msra.mxu0 0.0
        %451 = vmatprep.subr.mxu0 0.0
        %452 = vmatpush1.msra.mxu0 0.0
        %453 = vmatprep.subr.mxu0 0.0
        %454 = vmatpush1.msra.mxu0 0.0
        %455 = vmatprep.subr.mxu0 0.0
        %456 = vmatpush1.msra.mxu0 0.0
        %457 = vmatprep.subr.mxu0 0.0
        %458 = vmatpush1.msra.mxu0 0.0
        %459 = vmatprep.subr.mxu0 0.0
        %460 = vmatpush1.msra.mxu0 0.0
        %461 = vmatprep.subr.mxu0 0.0
        %462 = vmatpush1.msra.mxu0 0.0
        %463 = vmatprep.subr.mxu0 0.0
        %464 = vmatpush1.msra.mxu0 0.0
        %465 = vmatprep.subr.mxu0 0.0
        %466 = vmatpush1.msra.mxu0 0.0
        %467 = vmatprep.subr.mxu0 0.0
        %468 = vmatpush1.msra.mxu0 0.0
        %469 = vmatprep.subr.mxu0 0.0
        %470 = vmatpush1.msra.mxu0 0.0
        %471 = vmatprep.subr.mxu0 0.0
        %472 = vmatpush1.msra.mxu0 0.0
        %473 = vmatprep.subr.mxu0 0.0
        %474 = vmatpush1.msra.mxu0 0.0
        %475 = vmatprep.subr.mxu0 0.0
        %476 = vmatpush1.msra.mxu0 0.0
        %477 = vmatprep.subr.mxu0 0.0
        %478 = vmatpush1.msra.mxu0 0.0
        %479 = vmatprep.subr.mxu0 0.0
        %480 = vmatpush1.msra.mxu0 0.0
        %481 = vmatprep.subr.mxu0 0.0
        %482 = vmatpush1.msra.mxu0 0.0
        %483 = vmatprep.subr.mxu0 0.0
        %484 = vmatpush1.msra.mxu0 0.0
        %485 = vmatprep.subr.mxu0 0.0
        %486 = vmatpush1.msra.mxu0 0.0
        %487 = vmatprep.mubr.f32.mxu0 0.0
        %488 = vmatmul.mubr.f32.gmra.mrb[0].mxu0 %v187
        %v489 = vpop.f32.mrb[0].mxu0
        %v490 = vadd.f32 0.0, %v489
        %v491 = vpop.f32.mrb[0].mxu0
        %v492 = vadd.f32 0.0, %v491
        %493 = vmatprep.mubr.f32.mxu0 0.0
        %494 = vmatmul.mubr.f32.gmra.mrb[0].mxu0 %v190
        %v495 = vpop.f32.mrb[0].mxu0
        %v496 = vadd.f32 0.0, %v495
        %v497 = vpop.f32.mrb[0].mxu0
        %v498 = vadd.f32 0.0, %v497
        %499 = vdwg.mxu0
        %501 = vset.pattern.permute.xlu0 0
        %502 = vperm.xlu0 %501, %v183
        %v503 = vpop.permute.xlu0 %502
        %506 = vset.pattern.permute.xlu0 0
        %507 = vperm.xlu0 %506, %v184
        %v508 = vpop.permute.xlu0 %507
        %vm510 = vcmp.gt.f32.partialorder %v259, %v503
        %vm511 = vcmp.gt.f32.partialorder %v261, %v503
        %vm512 = vcmp.gt.f32.partialorder %v336, %v503
        %vm513 = vcmp.gt.f32.partialorder %v338, %v503
        %vm514 = vcmp.gt.f32.partialorder %v413, %v503
        %vm515 = vcmp.gt.f32.partialorder %v415, %v503
        %vm516 = vcmp.gt.f32.partialorder %v490, %v503
        %vm517 = vcmp.gt.f32.partialorder %v492, %v503
        %vm518 = vcmp.gt.f32.partialorder %v265, %v508
        %vm519 = vcmp.gt.f32.partialorder %v267, %v508
        %vm520 = vcmp.gt.f32.partialorder %v342, %v508
        %vm521 = vcmp.gt.f32.partialorder %v344, %v508
        %vm522 = vcmp.gt.f32.partialorder %v419, %v508
        %vm523 = vcmp.gt.f32.partialorder %v421, %v508
        %vm524 = vcmp.gt.f32.partialorder %v496, %v508
        %vm525 = vcmp.gt.f32.partialorder %v498, %v508
        %v526 = vsel %vm510, 1.0, -1.0
        %v527 = vsel %vm511, 1.0, -1.0
        %v528 = vsel %vm512, 1.0, -1.0
        %v529 = vsel %vm513, 1.0, -1.0
        %v530 = vsel %vm514, 1.0, -1.0
        %v531 = vsel %vm515, 1.0, -1.0
        %v532 = vsel %vm516, 1.0, -1.0
        %v533 = vsel %vm517, 1.0, -1.0
        %v534 = vsel %vm518, 1.0, -1.0
        %v535 = vsel %vm519, 1.0, -1.0
        %v536 = vsel %vm520, 1.0, -1.0
        %v537 = vsel %vm521, 1.0, -1.0
        %v538 = vsel %vm522, 1.0, -1.0
        %v539 = vsel %vm523, 1.0, -1.0
        %v540 = vsel %vm524, 1.0, -1.0
        %v541 = vsel %vm525, 1.0, -1.0
        %v543 = vsel %vm185, %v181, 0
        %v546 = vsel %vm185, %v182, 0
        %548 = vmatprep.subr.mxu0 %v527
        %549 = vmatpush1.msra.mxu0 %v526
        %550 = vmatprep.subr.mxu0 %v535
        %551 = vmatpush1.msra.mxu0 %v534
        %552 = vmatprep.subr.mxu0 0.0
        %553 = vmatpush1.msra.mxu0 0.0
        %554 = vmatprep.subr.mxu0 0.0
        %555 = vmatpush1.msra.mxu0 0.0
        %556 = vmatprep.subr.mxu0 0.0
        %557 = vmatpush1.msra.mxu0 0.0
        %558 = vmatprep.subr.mxu0 0.0
        %559 = vmatpush1.msra.mxu0 0.0
        %560 = vmatprep.subr.mxu0 0.0
        %561 = vmatpush1.msra.mxu0 0.0
        %562 = vmatprep.subr.mxu0 0.0
        %563 = vmatpush1.msra.mxu0 0.0
        %564 = vmatprep.subr.mxu0 0.0
        %565 = vmatpush1.msra.mxu0 0.0
        %566 = vmatprep.subr.mxu0 0.0
        %567 = vmatpush1.msra.mxu0 0.0
        %568 = vmatprep.subr.mxu0 0.0
        %569 = vmatpush1.msra.mxu0 0.0
        %570 = vmatprep.subr.mxu0 0.0
        %571 = vmatpush1.msra.mxu0 0.0
        %572 = vmatprep.subr.mxu0 0.0
        %573 = vmatpush1.msra.mxu0 0.0
        %574 = vmatprep.subr.mxu0 0.0
        %575 = vmatpush1.msra.mxu0 0.0
        %576 = vmatprep.subr.mxu0 0.0
        %577 = vmatpush1.msra.mxu0 0.0
        %578 = vmatprep.subr.mxu0 0.0
        %579 = vmatpush1.msra.mxu0 0.0
        %580 = vmatprep.subr.mxu0 0.0
        %581 = vmatpush1.msra.mxu0 0.0
        %582 = vmatprep.subr.mxu0 0.0
        %583 = vmatpush1.msra.mxu0 0.0
        %584 = vmatprep.subr.mxu0 0.0
        %585 = vmatpush1.msra.mxu0 0.0
        %586 = vmatprep.subr.mxu0 0.0
        %587 = vmatpush1.msra.mxu0 0.0
        %588 = vmatprep.subr.mxu0 0.0
        %589 = vmatpush1.msra.mxu0 0.0
        %590 = vmatprep.subr.mxu0 0.0
        %591 = vmatpush1.msra.mxu0 0.0
        %592 = vmatprep.subr.mxu0 0.0
        %593 = vmatpush1.msra.mxu0 0.0
        %594 = vmatprep.subr.mxu0 0.0
        %595 = vmatpush1.msra.mxu0 0.0
        %596 = vmatprep.subr.mxu0 0.0
        %597 = vmatpush1.msra.mxu0 0.0
        %598 = vmatprep.subr.mxu0 0.0
        %599 = vmatpush1.msra.mxu0 0.0
        %600 = vmatprep.subr.mxu0 0.0
        %601 = vmatpush1.msra.mxu0 0.0
        %602 = vmatprep.subr.mxu0 0.0
        %603 = vmatpush1.msra.mxu0 0.0
        %604 = vmatprep.subr.mxu0 0.0
        %605 = vmatpush1.msra.mxu0 0.0
        %606 = vmatprep.subr.mxu0 0.0
        %607 = vmatpush1.msra.mxu0 0.0
        %608 = vmatprep.subr.mxu0 0.0
        %609 = vmatpush1.msra.mxu0 0.0
        %610 = vmatprep.subr.mxu0 0.0
        %611 = vmatpush1.msra.mxu0 0.0
        %612 = vmatprep.mubr.f32.mxu0 0.0
        %613 = vmatmul.mubr.f32.gmra.mrb[0].mxu0 %v543
        %v614 = vpop.f32.mrb[0].mxu0
        %v615 = vadd.f32 0.0, %v614
        %v616 = vpop.f32.mrb[0].mxu0
        %v617 = vadd.f32 0.0, %v616
        %618 = vmatprep.mubr.f32.mxu0 0.0
        %619 = vmatmul.mubr.f32.gmra.mrb[0].mxu0 %v546
        %v620 = vpop.f32.mrb[0].mxu0
        %v621 = vadd.f32 0.0, %v620
        %v622 = vpop.f32.mrb[0].mxu0
        %v623 = vadd.f32 0.0, %v622
        %624 = vdwg.mxu0
        %625 = vmatprep.subr.mxu0 %v529
        %626 = vmatpush1.msra.mxu0 %v528
        %627 = vmatprep.subr.mxu0 %v537
        %628 = vmatpush1.msra.mxu0 %v536
        %629 = vmatprep.subr.mxu0 0.0
        %630 = vmatpush1.msra.mxu0 0.0
        %631 = vmatprep.subr.mxu0 0.0
        %632 = vmatpush1.msra.mxu0 0.0
        %633 = vmatprep.subr.mxu0 0.0
        %634 = vmatpush1.msra.mxu0 0.0
        %635 = vmatprep.subr.mxu0 0.0
        %636 = vmatpush1.msra.mxu0 0.0
        %637 = vmatprep.subr.mxu0 0.0
        %638 = vmatpush1.msra.mxu0 0.0
        %639 = vmatprep.subr.mxu0 0.0
        %640 = vmatpush1.msra.mxu0 0.0
        %641 = vmatprep.subr.mxu0 0.0
        %642 = vmatpush1.msra.mxu0 0.0
        %643 = vmatprep.subr.mxu0 0.0
        %644 = vmatpush1.msra.mxu0 0.0
        %645 = vmatprep.subr.mxu0 0.0
        %646 = vmatpush1.msra.mxu0 0.0
        %647 = vmatprep.subr.mxu0 0.0
        %648 = vmatpush1.msra.mxu0 0.0
        %649 = vmatprep.subr.mxu0 0.0
        %650 = vmatpush1.msra.mxu0 0.0
        %651 = vmatprep.subr.mxu0 0.0
        %652 = vmatpush1.msra.mxu0 0.0
        %653 = vmatprep.subr.mxu0 0.0
        %654 = vmatpush1.msra.mxu0 0.0
        %655 = vmatprep.subr.mxu0 0.0
        %656 = vmatpush1.msra.mxu0 0.0
        %657 = vmatprep.subr.mxu0 0.0
        %658 = vmatpush1.msra.mxu0 0.0
        %659 = vmatprep.subr.mxu0 0.0
        %660 = vmatpush1.msra.mxu0 0.0
        %661 = vmatprep.subr.mxu0 0.0
        %662 = vmatpush1.msra.mxu0 0.0
        %663 = vmatprep.subr.mxu0 0.0
        %664 = vmatpush1.msra.mxu0 0.0
        %665 = vmatprep.subr.mxu0 0.0
        %666 = vmatpush1.msra.mxu0 0.0
        %667 = vmatprep.subr.mxu0 0.0
        %668 = vmatpush1.msra.mxu0 0.0
        %669 = vmatprep.subr.mxu0 0.0
        %670 = vmatpush1.msra.mxu0 0.0
        %671 = vmatprep.subr.mxu0 0.0
        %672 = vmatpush1.msra.mxu0 0.0
        %673 = vmatprep.subr.mxu0 0.0
        %674 = vmatpush1.msra.mxu0 0.0
        %675 = vmatprep.subr.mxu0 0.0
        %676 = vmatpush1.msra.mxu0 0.0
        %677 = vmatprep.subr.mxu0 0.0
        %678 = vmatpush1.msra.mxu0 0.0
        %679 = vmatprep.subr.mxu0 0.0
        %680 = vmatpush1.msra.mxu0 0.0
        %681 = vmatprep.subr.mxu0 0.0
        %682 = vmatpush1.msra.mxu0 0.0
        %683 = vmatprep.subr.mxu0 0.0
        %684 = vmatpush1.msra.mxu0 0.0
        %685 = vmatprep.subr.mxu0 0.0
        %686 = vmatpush1.msra.mxu0 0.0
        %687 = vmatprep.subr.mxu0 0.0
        %688 = vmatpush1.msra.mxu0 0.0
        %689 = vmatprep.mubr.f32.mxu0 0.0
        %690 = vmatmul.mubr.f32.gmra.mrb[0].mxu0 %v543
        %v691 = vpop.f32.mrb[0].mxu0
        %v692 = vadd.f32 0.0, %v691
        %v693 = vpop.f32.mrb[0].mxu0
        %v694 = vadd.f32 0.0, %v693
        %695 = vmatprep.mubr.f32.mxu0 0.0
        %696 = vmatmul.mubr.f32.gmra.mrb[0].mxu0 %v546
        %v697 = vpop.f32.mrb[0].mxu0
        %v698 = vadd.f32 0.0, %v697
        %v699 = vpop.f32.mrb[0].mxu0
        %v700 = vadd.f32 0.0, %v699
        %701 = vdwg.mxu0
        %702 = vmatprep.subr.mxu0 %v531
        %703 = vmatpush1.msra.mxu0 %v530
        %704 = vmatprep.subr.mxu0 %v539
        %705 = vmatpush1.msra.mxu0 %v538
        %706 = vmatprep.subr.mxu0 0.0
        %707 = vmatpush1.msra.mxu0 0.0
        %708 = vmatprep.subr.mxu0 0.0
        %709 = vmatpush1.msra.mxu0 0.0
        %710 = vmatprep.subr.mxu0 0.0
        %711 = vmatpush1.msra.mxu0 0.0
        %712 = vmatprep.subr.mxu0 0.0
        %713 = vmatpush1.msra.mxu0 0.0
        %714 = vmatprep.subr.mxu0 0.0
        %715 = vmatpush1.msra.mxu0 0.0
        %716 = vmatprep.subr.mxu0 0.0
        %717 = vmatpush1.msra.mxu0 0.0
        %718 = vmatprep.subr.mxu0 0.0
        %719 = vmatpush1.msra.mxu0 0.0
        %720 = vmatprep.subr.mxu0 0.0
        %721 = vmatpush1.msra.mxu0 0.0
        %722 = vmatprep.subr.mxu0 0.0
        %723 = vmatpush1.msra.mxu0 0.0
        %724 = vmatprep.subr.mxu0 0.0
        %725 = vmatpush1.msra.mxu0 0.0
        %726 = vmatprep.subr.mxu0 0.0
        %727 = vmatpush1.msra.mxu0 0.0
        %728 = vmatprep.subr.mxu0 0.0
        %729 = vmatpush1.msra.mxu0 0.0
        %730 = vmatprep.subr.mxu0 0.0
        %731 = vmatpush1.msra.mxu0 0.0
        %732 = vmatprep.subr.mxu0 0.0
        %733 = vmatpush1.msra.mxu0 0.0
        %734 = vmatprep.subr.mxu0 0.0
        %735 = vmatpush1.msra.mxu0 0.0
        %736 = vmatprep.subr.mxu0 0.0
        %737 = vmatpush1.msra.mxu0 0.0
        %738 = vmatprep.subr.mxu0 0.0
        %739 = vmatpush1.msra.mxu0 0.0
        %740 = vmatprep.subr.mxu0 0.0
        %741 = vmatpush1.msra.mxu0 0.0
        %742 = vmatprep.subr.mxu0 0.0
        %743 = vmatpush1.msra.mxu0 0.0
        %744 = vmatprep.subr.mxu0 0.0
        %745 = vmatpush1.msra.mxu0 0.0
        %746 = vmatprep.subr.mxu0 0.0
        %747 = vmatpush1.msra.mxu0 0.0
        %748 = vmatprep.subr.mxu0 0.0
        %749 = vmatpush1.msra.mxu0 0.0
        %750 = vmatprep.subr.mxu0 0.0
        %751 = vmatpush1.msra.mxu0 0.0
        %752 = vmatprep.subr.mxu0 0.0
        %753 = vmatpush1.msra.mxu0 0.0
        %754 = vmatprep.subr.mxu0 0.0
        %755 = vmatpush1.msra.mxu0 0.0
        %756 = vmatprep.subr.mxu0 0.0
        %757 = vmatpush1.msra.mxu0 0.0
        %758 = vmatprep.subr.mxu0 0.0
        %759 = vmatpush1.msra.mxu0 0.0
        %760 = vmatprep.subr.mxu0 0.0
        %761 = vmatpush1.msra.mxu0 0.0
        %762 = vmatprep.subr.mxu0 0.0
        %763 = vmatpush1.msra.mxu0 0.0
        %764 = vmatprep.subr.mxu0 0.0
        %765 = vmatpush1.msra.mxu0 0.0
        %766 = vmatprep.mubr.f32.mxu0 0.0
        %767 = vmatmul.mubr.f32.gmra.mrb[0].mxu0 %v543
        %v768 = vpop.f32.mrb[0].mxu0
        %v769 = vadd.f32 0.0, %v768
        %v770 = vpop.f32.mrb[0].mxu0
        %v771 = vadd.f32 0.0, %v770
        %772 = vmatprep.mubr.f32.mxu0 0.0
        %773 = vmatmul.mubr.f32.gmra.mrb[0].mxu0 %v546
        %v774 = vpop.f32.mrb[0].mxu0
        %v775 = vadd.f32 0.0, %v774
        %v776 = vpop.f32.mrb[0].mxu0
        %v777 = vadd.f32 0.0, %v776
        %778 = vdwg.mxu0
        %779 = vmatprep.subr.mxu0 %v533
        %780 = vmatpush1.msra.mxu0 %v532
        %781 = vmatprep.subr.mxu0 %v541
        %782 = vmatpush1.msra.mxu0 %v540
        %783 = vmatprep.subr.mxu0 0.0
        %784 = vmatpush1.msra.mxu0 0.0
        %785 = vmatprep.subr.mxu0 0.0
        %786 = vmatpush1.msra.mxu0 0.0
        %787 = vmatprep.subr.mxu0 0.0
        %788 = vmatpush1.msra.mxu0 0.0
        %789 = vmatprep.subr.mxu0 0.0
        %790 = vmatpush1.msra.mxu0 0.0
        %791 = vmatprep.subr.mxu0 0.0
        %792 = vmatpush1.msra.mxu0 0.0
        %793 = vmatprep.subr.mxu0 0.0
        %794 = vmatpush1.msra.mxu0 0.0
        %795 = vmatprep.subr.mxu0 0.0
        %796 = vmatpush1.msra.mxu0 0.0
        %797 = vmatprep.subr.mxu0 0.0
        %798 = vmatpush1.msra.mxu0 0.0
        %799 = vmatprep.subr.mxu0 0.0
        %800 = vmatpush1.msra.mxu0 0.0
        %801 = vmatprep.subr.mxu0 0.0
        %802 = vmatpush1.msra.mxu0 0.0
        %803 = vmatprep.subr.mxu0 0.0
        %804 = vmatpush1.msra.mxu0 0.0
        %805 = vmatprep.subr.mxu0 0.0
        %806 = vmatpush1.msra.mxu0 0.0
        %807 = vmatprep.subr.mxu0 0.0
        %808 = vmatpush1.msra.mxu0 0.0
        %809 = vmatprep.subr.mxu0 0.0
        %810 = vmatpush1.msra.mxu0 0.0
        %811 = vmatprep.subr.mxu0 0.0
        %812 = vmatpush1.msra.mxu0 0.0
        %813 = vmatprep.subr.mxu0 0.0
        %814 = vmatpush1.msra.mxu0 0.0
        %815 = vmatprep.subr.mxu0 0.0
        %816 = vmatpush1.msra.mxu0 0.0
        %817 = vmatprep.subr.mxu0 0.0
        %818 = vmatpush1.msra.mxu0 0.0
        %819 = vmatprep.subr.mxu0 0.0
        %820 = vmatpush1.msra.mxu0 0.0
        %821 = vmatprep.subr.mxu0 0.0
        %822 = vmatpush1.msra.mxu0 0.0
        %823 = vmatprep.subr.mxu0 0.0
        %824 = vmatpush1.msra.mxu0 0.0
        %825 = vmatprep.subr.mxu0 0.0
        %826 = vmatpush1.msra.mxu0 0.0
        %827 = vmatprep.subr.mxu0 0.0
        %828 = vmatpush1.msra.mxu0 0.0
        %829 = vmatprep.subr.mxu0 0.0
        %830 = vmatpush1.msra.mxu0 0.0
        %831 = vmatprep.subr.mxu0 0.0
        %832 = vmatpush1.msra.mxu0 0.0
        %833 = vmatprep.subr.mxu0 0.0
        %834 = vmatpush1.msra.mxu0 0.0
        %835 = vmatprep.subr.mxu0 0.0
        %836 = vmatpush1.msra.mxu0 0.0
        %837 = vmatprep.subr.mxu0 0.0
        %838 = vmatpush1.msra.mxu0 0.0
        %839 = vmatprep.subr.mxu0 0.0
        %840 = vmatpush1.msra.mxu0 0.0
        %841 = vmatprep.subr.mxu0 0.0
        %842 = vmatpush1.msra.mxu0 0.0
        %843 = vmatprep.mubr.f32.mxu0 0.0
        %844 = vmatmul.mubr.f32.gmra.mrb[0].mxu0 %v543
        %v845 = vpop.f32.mrb[0].mxu0
        %v846 = vadd.f32 0.0, %v845
        %v847 = vpop.f32.mrb[0].mxu0
        %v848 = vadd.f32 0.0, %v847
        %849 = vmatprep.mubr.f32.mxu0 0.0
        %850 = vmatmul.mubr.f32.gmra.mrb[0].mxu0 %v546
        %v851 = vpop.f32.mrb[0].mxu0
        %v852 = vadd.f32 0.0, %v851
        %v853 = vpop.f32.mrb[0].mxu0
        %v854 = vadd.f32 0.0, %v853
        %855 = vdwg.mxu0
        %856 = vset.pattern.permute.xlu0 1
        %857 = vperm.xlu0 %856, %v183
        %v858 = vpop.permute.xlu0 %857
        %860 = vset.pattern.permute.xlu0 1
        %861 = vperm.xlu0 %860, %v184
        %v862 = vpop.permute.xlu0 %861
        %vm864 = vcmp.gt.f32.partialorder %v615, %v858
        %vm865 = vcmp.gt.f32.partialorder %v617, %v858
        %vm866 = vcmp.gt.f32.partialorder %v692, %v858
        %vm867 = vcmp.gt.f32.partialorder %v694, %v858
        %vm868 = vcmp.gt.f32.partialorder %v769, %v858
        %vm869 = vcmp.gt.f32.partialorder %v771, %v858
        %vm870 = vcmp.gt.f32.partialorder %v846, %v858
        %vm871 = vcmp.gt.f32.partialorder %v848, %v858
        %vm872 = vcmp.gt.f32.partialorder %v621, %v862
        %vm873 = vcmp.gt.f32.partialorder %v623, %v862
        %vm874 = vcmp.gt.f32.partialorder %v698, %v862
        %vm875 = vcmp.gt.f32.partialorder %v700, %v862
        %vm876 = vcmp.gt.f32.partialorder %v775, %v862
        %vm877 = vcmp.gt.f32.partialorder %v777, %v862
        %vm878 = vcmp.gt.f32.partialorder %v852, %v862
        %vm879 = vcmp.gt.f32.partialorder %v854, %v862
        %880 = vset.pattern.permute.xlu0 2
        %881 = vperm.xlu0 %880, %v183
        %v882 = vpop.permute.xlu0 %881
        %884 = vset.pattern.permute.xlu0 2
        %885 = vperm.xlu0 %884, %v184
        %v886 = vpop.permute.xlu0 %885
        %v888 = vsel %vm864, %v882, 0.0
        %v889 = vsel %vm865, %v882, 0.0
        %v890 = vsel %vm866, %v882, 0.0
        %v891 = vsel %vm867, %v882, 0.0
        %v892 = vsel %vm868, %v882, 0.0
        %v893 = vsel %vm869, %v882, 0.0
        %v894 = vsel %vm870, %v882, 0.0
        %v895 = vsel %vm871, %v882, 0.0
        %v896 = vsel %vm872, %v886, 0.0
        %v897 = vsel %vm873, %v886, 0.0
        %v898 = vsel %vm874, %v886, 0.0
        %v899 = vsel %vm875, %v886, 0.0
        %v900 = vsel %vm876, %v886, 0.0
        %v901 = vsel %vm877, %v886, 0.0
        %v902 = vsel %vm878, %v886, 0.0
        %v903 = vsel %vm879, %v886, 0.0
        %v904 = vadd.f32 %v888, %v896
        %v905 = vrot.slane %v904, 4
        %v906 = vadd.f32 %v904, %v905
        %v907 = vrot.slane %v906, 2
        %v908 = vadd.f32 %v906, %v907
        %v909 = vrot.slane %v908, 1
        %v910 = vadd.f32 %v908, %v909
        %v911 = vadd.f32 %v889, %v897
        %v912 = vrot.slane %v911, 4
        %v913 = vadd.f32 %v911, %v912
        %v914 = vrot.slane %v913, 2
        %v915 = vadd.f32 %v913, %v914
        %v916 = vrot.slane %v915, 1
        %v917 = vadd.f32 %v915, %v916
        %v918 = vadd.f32 %v890, %v898
        %v919 = vrot.slane %v918, 4
        %v920 = vadd.f32 %v918, %v919
        %v921 = vrot.slane %v920, 2
        %v922 = vadd.f32 %v920, %v921
        %v923 = vrot.slane %v922, 1
        %v924 = vadd.f32 %v922, %v923
        %v925 = vadd.f32 %v891, %v899
        %v926 = vrot.slane %v925, 4
        %v927 = vadd.f32 %v925, %v926
        %v928 = vrot.slane %v927, 2
        %v929 = vadd.f32 %v927, %v928
        %v930 = vrot.slane %v929, 1
        %v931 = vadd.f32 %v929, %v930
        %v932 = vadd.f32 %v892, %v900
        %v933 = vrot.slane %v932, 4
        %v934 = vadd.f32 %v932, %v933
        %v935 = vrot.slane %v934, 2
        %v936 = vadd.f32 %v934, %v935
        %v937 = vrot.slane %v936, 1
        %v938 = vadd.f32 %v936, %v937
        %v939 = vadd.f32 %v893, %v901
        %v940 = vrot.slane %v939, 4
        %v941 = vadd.f32 %v939, %v940
        %v942 = vrot.slane %v941, 2
        %v943 = vadd.f32 %v941, %v942
        %v944 = vrot.slane %v943, 1
        %v945 = vadd.f32 %v943, %v944
        %v946 = vadd.f32 %v894, %v902
        %v947 = vrot.slane %v946, 4
        %v948 = vadd.f32 %v946, %v947
        %v949 = vrot.slane %v948, 2
        %v950 = vadd.f32 %v948, %v949
        %v951 = vrot.slane %v950, 1
        %v952 = vadd.f32 %v950, %v951
        %v953 = vadd.f32 %v895, %v903
        %v954 = vrot.slane %v953, 4
        %v955 = vadd.f32 %v953, %v954
        %v956 = vrot.slane %v955, 2
        %v957 = vadd.f32 %v955, %v956
        %v958 = vrot.slane %v957, 1
        %v959 = vadd.f32 %v957, %v958
        %vm960 = vcmp.gt.f32.partialorder %v183, 0.0
        %vm961 = vcmp.gt.f32.partialorder %v184, 0.0
        %v962 = vsel %vm960, 1, 0
        %v963 = vsel %vm961, 1, 0
        %964 = vset.pattern.permute.xlu0 3
        %965 = vperm.xlu0 %964, %v962
        %v966 = vpop.permute.xlu0 %965
        %967 = vset.pattern.permute.xlu0 3
        %968 = vperm.xlu0 %967, %v963
        %v969 = vpop.permute.xlu0 %968
        %vm970 = vcmp.eq.s32.totalorder %v966, 1
        %vm971 = vcmp.eq.s32.totalorder %v969, 1
        %vm972 = vmxor %vm510, %vm970
        %vm973 = vmxor %vm511, %vm970
        %vm974 = vmxor %vm512, %vm970
        %vm975 = vmxor %vm513, %vm970
        %vm976 = vmxor %vm514, %vm970
        %vm977 = vmxor %vm515, %vm970
        %vm978 = vmxor %vm516, %vm970
        %vm979 = vmxor %vm517, %vm970
        %vm980 = vmxor %vm518, %vm971
        %vm981 = vmxor %vm519, %vm971
        %vm982 = vmxor %vm520, %vm971
        %vm983 = vmxor %vm521, %vm971
        %vm984 = vmxor %vm522, %vm971
        %vm985 = vmxor %vm523, %vm971
        %vm986 = vmxor %vm524, %vm971
        %vm987 = vmxor %vm525, %vm971
        %vm988 = vmxor %vm972, 1
        %vm989 = vmxor %vm973, 1
        %vm990 = vmxor %vm974, 1
        %vm991 = vmxor %vm975, 1
        %vm992 = vmxor %vm976, 1
        %vm993 = vmxor %vm977, 1
        %vm994 = vmxor %vm978, 1
        %vm995 = vmxor %vm979, 1
        %vm996 = vmxor %vm980, 1
        %vm997 = vmxor %vm981, 1
        %vm998 = vmxor %vm982, 1
        %vm999 = vmxor %vm983, 1
        %vm1000 = vmxor %vm984, 1
        %vm1001 = vmxor %vm985, 1
        %vm1002 = vmxor %vm986, 1
        %vm1003 = vmxor %vm987, 1
        %1004 = vset.pattern.permute.xlu0 5
        %1005 = vperm.xlu0 %1004, %v962
        %v1006 = vpop.permute.xlu0 %1005
        %1007 = vset.pattern.permute.xlu0 5
        %1008 = vperm.xlu0 %1007, %v963
        %v1009 = vpop.permute.xlu0 %1008
        %vm1010 = vcmp.eq.s32.totalorder %v1006, 1
        %vm1011 = vcmp.eq.s32.totalorder %v1009, 1
        %vm1012 = vmand %vm988, %vm1010
        %vm1013 = vmand %vm989, %vm1010
        %vm1014 = vmand %vm990, %vm1010
        %vm1015 = vmand %vm991, %vm1010
        %vm1016 = vmand %vm992, %vm1010
        %vm1017 = vmand %vm993, %vm1010
        %vm1018 = vmand %vm994, %vm1010
        %vm1019 = vmand %vm995, %vm1010
        %vm1020 = vmand %vm996, %vm1011
        %vm1021 = vmand %vm997, %vm1011
        %vm1022 = vmand %vm998, %vm1011
        %vm1023 = vmand %vm999, %vm1011
        %vm1024 = vmand %vm1000, %vm1011
        %vm1025 = vmand %vm1001, %vm1011
        %vm1026 = vmand %vm1002, %vm1011
        %vm1027 = vmand %vm1003, %vm1011
        %1028 = vset.pattern.permute.xlu0 6
        %1029 = vperm.xlu0 %1028, %v183
        %v1030 = vpop.permute.xlu0 %1029
        %1032 = vset.pattern.permute.xlu0 6
        %1033 = vperm.xlu0 %1032, %v184
        %v1034 = vpop.permute.xlu0 %1033
        %v1036 = vsel %vm1012, %v1030, 0.0
        %v1037 = vsel %vm1013, %v1030, 0.0
        %v1038 = vsel %vm1014, %v1030, 0.0
        %v1039 = vsel %vm1015, %v1030, 0.0
        %v1040 = vsel %vm1016, %v1030, 0.0
        %v1041 = vsel %vm1017, %v1030, 0.0
        %v1042 = vsel %vm1018, %v1030, 0.0
        %v1043 = vsel %vm1019, %v1030, 0.0
        %v1044 = vsel %vm1020, %v1034, 0.0
        %v1045 = vsel %vm1021, %v1034, 0.0
        %v1046 = vsel %vm1022, %v1034, 0.0
        %v1047 = vsel %vm1023, %v1034, 0.0
        %v1048 = vsel %vm1024, %v1034, 0.0
        %v1049 = vsel %vm1025, %v1034, 0.0
        %v1050 = vsel %vm1026, %v1034, 0.0
        %v1051 = vsel %vm1027, %v1034, 0.0
        %v1052 = vmax.f32 %v1036, %v1044
        %v1053 = vrot.slane %v1052, 4
        %v1054 = vmax.f32 %v1052, %v1053
        %v1055 = vrot.slane %v1054, 2
        %v1056 = vmax.f32 %v1054, %v1055
        %v1057 = vrot.slane %v1056, 1
        %v1058 = vmax.f32 %v1056, %v1057
        %v1059 = vmax.f32 %v1037, %v1045
        %v1060 = vrot.slane %v1059, 4
        %v1061 = vmax.f32 %v1059, %v1060
        %v1062 = vrot.slane %v1061, 2
        %v1063 = vmax.f32 %v1061, %v1062
        %v1064 = vrot.slane %v1063, 1
        %v1065 = vmax.f32 %v1063, %v1064
        %v1066 = vmax.f32 %v1038, %v1046
        %v1067 = vrot.slane %v1066, 4
        %v1068 = vmax.f32 %v1066, %v1067
        %v1069 = vrot.slane %v1068, 2
        %v1070 = vmax.f32 %v1068, %v1069
        %v1071 = vrot.slane %v1070, 1
        %v1072 = vmax.f32 %v1070, %v1071
        %v1073 = vmax.f32 %v1039, %v1047
        %v1074 = vrot.slane %v1073, 4
        %v1075 = vmax.f32 %v1073, %v1074
        %v1076 = vrot.slane %v1075, 2
        %v1077 = vmax.f32 %v1075, %v1076
        %v1078 = vrot.slane %v1077, 1
        %v1079 = vmax.f32 %v1077, %v1078
        %v1080 = vmax.f32 %v1040, %v1048
        %v1081 = vrot.slane %v1080, 4
        %v1082 = vmax.f32 %v1080, %v1081
        %v1083 = vrot.slane %v1082, 2
        %v1084 = vmax.f32 %v1082, %v1083
        %v1085 = vrot.slane %v1084, 1
        %v1086 = vmax.f32 %v1084, %v1085
        %v1087 = vmax.f32 %v1041, %v1049
        %v1088 = vrot.slane %v1087, 4
        %v1089 = vmax.f32 %v1087, %v1088
        %v1090 = vrot.slane %v1089, 2
        %v1091 = vmax.f32 %v1089, %v1090
        %v1092 = vrot.slane %v1091, 1
        %v1093 = vmax.f32 %v1091, %v1092
        %v1094 = vmax.f32 %v1042, %v1050
        %v1095 = vrot.slane %v1094, 4
        %v1096 = vmax.f32 %v1094, %v1095
        %v1097 = vrot.slane %v1096, 2
        %v1098 = vmax.f32 %v1096, %v1097
        %v1099 = vrot.slane %v1098, 1
        %v1100 = vmax.f32 %v1098, %v1099
        %v1101 = vmax.f32 %v1043, %v1051
        %v1102 = vrot.slane %v1101, 4
        %v1103 = vmax.f32 %v1101, %v1102
        %v1104 = vrot.slane %v1103, 2
        %v1105 = vmax.f32 %v1103, %v1104
        %v1106 = vrot.slane %v1105, 1
        %v1107 = vmax.f32 %v1105, %v1106
        %vm1108 = vcmp.eq.f32.partialorder %v1036, %v1058
        %vm1109 = vcmp.eq.f32.partialorder %v1037, %v1065
        %vm1110 = vcmp.eq.f32.partialorder %v1038, %v1072
        %vm1111 = vcmp.eq.f32.partialorder %v1039, %v1079
        %vm1112 = vcmp.eq.f32.partialorder %v1040, %v1086
        %vm1113 = vcmp.eq.f32.partialorder %v1041, %v1093
        %vm1114 = vcmp.eq.f32.partialorder %v1042, %v1100
        %vm1115 = vcmp.eq.f32.partialorder %v1043, %v1107
        %vm1116 = vcmp.eq.f32.partialorder %v1044, %v1058
        %vm1117 = vcmp.eq.f32.partialorder %v1045, %v1065
        %vm1118 = vcmp.eq.f32.partialorder %v1046, %v1072
        %vm1119 = vcmp.eq.f32.partialorder %v1047, %v1079
        %vm1120 = vcmp.eq.f32.partialorder %v1048, %v1086
        %vm1121 = vcmp.eq.f32.partialorder %v1049, %v1093
        %vm1122 = vcmp.eq.f32.partialorder %v1050, %v1100
        %vm1123 = vcmp.eq.f32.partialorder %v1051, %v1107
        %vm1124 = vmand %vm1012, %vm1108
        %vm1125 = vmand %vm1013, %vm1109
        %vm1126 = vmand %vm1014, %vm1110
        %vm1127 = vmand %vm1015, %vm1111
        %vm1128 = vmand %vm1016, %vm1112
        %vm1129 = vmand %vm1017, %vm1113
        %vm1130 = vmand %vm1018, %vm1114
        %vm1131 = vmand %vm1019, %vm1115
        %vm1132 = vmand %vm1020, %vm1116
        %vm1133 = vmand %vm1021, %vm1117
        %vm1134 = vmand %vm1022, %vm1118
        %vm1135 = vmand %vm1023, %vm1119
        %vm1136 = vmand %vm1024, %vm1120
        %vm1137 = vmand %vm1025, %vm1121
        %vm1138 = vmand %vm1026, %vm1122
        %vm1139 = vmand %vm1027, %vm1123
        %1140 = vset.pattern.permute.xlu0 4
        %1141 = vperm.xlu0 %1140, %v183
        %v1142 = vpop.permute.xlu0 %1141
        %1144 = vset.pattern.permute.xlu0 4
        %1145 = vperm.xlu0 %1144, %v184
        %v1146 = vpop.permute.xlu0 %1145
        %v1148 = vsel %vm1124, %v1142, 0.0
        %v1149 = vsel %vm1125, %v1142, 0.0
        %v1150 = vsel %vm1126, %v1142, 0.0
        %v1151 = vsel %vm1127, %v1142, 0.0
        %v1152 = vsel %vm1128, %v1142, 0.0
        %v1153 = vsel %vm1129, %v1142, 0.0
        %v1154 = vsel %vm1130, %v1142, 0.0
        %v1155 = vsel %vm1131, %v1142, 0.0
        %v1156 = vsel %vm1132, %v1146, 0.0
        %v1157 = vsel %vm1133, %v1146, 0.0
        %v1158 = vsel %vm1134, %v1146, 0.0
        %v1159 = vsel %vm1135, %v1146, 0.0
        %v1160 = vsel %vm1136, %v1146, 0.0
        %v1161 = vsel %vm1137, %v1146, 0.0
        %v1162 = vsel %vm1138, %v1146, 0.0
        %v1163 = vsel %vm1139, %v1146, 0.0
        %v1164 = vadd.f32 %v1148, %v1156
        %v1165 = vrot.slane %v1164, 4
        %v1166 = vadd.f32 %v1164, %v1165
        %v1167 = vrot.slane %v1166, 2
        %v1168 = vadd.f32 %v1166, %v1167
        %v1169 = vrot.slane %v1168, 1
        %v1170 = vadd.f32 %v1168, %v1169
        %v1171 = vadd.f32 %v1149, %v1157
        %v1172 = vrot.slane %v1171, 4
        %v1173 = vadd.f32 %v1171, %v1172
        %v1174 = vrot.slane %v1173, 2
        %v1175 = vadd.f32 %v1173, %v1174
        %v1176 = vrot.slane %v1175, 1
        %v1177 = vadd.f32 %v1175, %v1176
        %v1178 = vadd.f32 %v1150, %v1158
        %v1179 = vrot.slane %v1178, 4
        %v1180 = vadd.f32 %v1178, %v1179
        %v1181 = vrot.slane %v1180, 2
        %v1182 = vadd.f32 %v1180, %v1181
        %v1183 = vrot.slane %v1182, 1
        %v1184 = vadd.f32 %v1182, %v1183
        %v1185 = vadd.f32 %v1151, %v1159
        %v1186 = vrot.slane %v1185, 4
        %v1187 = vadd.f32 %v1185, %v1186
        %v1188 = vrot.slane %v1187, 2
        %v1189 = vadd.f32 %v1187, %v1188
        %v1190 = vrot.slane %v1189, 1
        %v1191 = vadd.f32 %v1189, %v1190
        %v1192 = vadd.f32 %v1152, %v1160
        %v1193 = vrot.slane %v1192, 4
        %v1194 = vadd.f32 %v1192, %v1193
        %v1195 = vrot.slane %v1194, 2
        %v1196 = vadd.f32 %v1194, %v1195
        %v1197 = vrot.slane %v1196, 1
        %v1198 = vadd.f32 %v1196, %v1197
        %v1199 = vadd.f32 %v1153, %v1161
        %v1200 = vrot.slane %v1199, 4
        %v1201 = vadd.f32 %v1199, %v1200
        %v1202 = vrot.slane %v1201, 2
        %v1203 = vadd.f32 %v1201, %v1202
        %v1204 = vrot.slane %v1203, 1
        %v1205 = vadd.f32 %v1203, %v1204
        %v1206 = vadd.f32 %v1154, %v1162
        %v1207 = vrot.slane %v1206, 4
        %v1208 = vadd.f32 %v1206, %v1207
        %v1209 = vrot.slane %v1208, 2
        %v1210 = vadd.f32 %v1208, %v1209
        %v1211 = vrot.slane %v1210, 1
        %v1212 = vadd.f32 %v1210, %v1211
        %v1213 = vadd.f32 %v1155, %v1163
        %v1214 = vrot.slane %v1213, 4
        %v1215 = vadd.f32 %v1213, %v1214
        %v1216 = vrot.slane %v1215, 2
        %v1217 = vadd.f32 %v1215, %v1216
        %v1218 = vrot.slane %v1217, 1
        %v1219 = vadd.f32 %v1217, %v1218
        %vm1220 = vcmp.gt.f32.partialorder %v1058, 0.5
        %vm1221 = vcmp.gt.f32.partialorder %v1065, 0.5
        %vm1222 = vcmp.gt.f32.partialorder %v1072, 0.5
        %vm1223 = vcmp.gt.f32.partialorder %v1079, 0.5
        %vm1224 = vcmp.gt.f32.partialorder %v1086, 0.5
        %vm1225 = vcmp.gt.f32.partialorder %v1093, 0.5
        %vm1226 = vcmp.gt.f32.partialorder %v1100, 0.5
        %vm1227 = vcmp.gt.f32.partialorder %v1107, 0.5
        %v1228 = vsel %vm1220, %v1170, %v910
        %v1229 = vsel %vm1221, %v1177, %v917
        %v1230 = vsel %vm1222, %v1184, %v924
        %v1231 = vsel %vm1223, %v1191, %v931
        %v1232 = vsel %vm1224, %v1198, %v938
        %v1233 = vsel %vm1225, %v1205, %v945
        %v1234 = vsel %vm1226, %v1212, %v952
        %v1235 = vsel %vm1227, %v1219, %v959
        %1237 = vst [vmem:[%s161] ss:$8 sm:$0x1] %v1228
        %1238 = vst [vmem:[%s161] ss:$8 sm:$0x0] %v1228
        %s1240 = scalar_lea.vmem %s161, 1 [#allocation5]
        %1241 = vst [vmem:[%s1240] ss:$8 sm:$0x1] %v1229
        %1242 = vst [vmem:[%s1240] ss:$8 sm:$0x0] %v1229
        %s1244 = scalar_lea.vmem %s161, 2 [#allocation5]
        %1245 = vst [vmem:[%s1244] ss:$8 sm:$0x1] %v1230
        %1246 = vst [vmem:[%s1244] ss:$8 sm:$0x0] %v1230
        %s1248 = scalar_lea.vmem %s161, 3 [#allocation5]
        %1249 = vst [vmem:[%s1248] ss:$8 sm:$0x1] %v1231
        %1250 = vst [vmem:[%s1248] ss:$8 sm:$0x0] %v1231
        %s1252 = scalar_lea.vmem %s161, 4 [#allocation5]
        %1253 = vst [vmem:[%s1252] ss:$8 sm:$0x1] %v1232
        %1254 = vst [vmem:[%s1252] ss:$8 sm:$0x0] %v1232
        %s1256 = scalar_lea.vmem %s161, 5 [#allocation5]
        %1257 = vst [vmem:[%s1256] ss:$8 sm:$0x1] %v1233
        %1258 = vst [vmem:[%s1256] ss:$8 sm:$0x0] %v1233
        %s1260 = scalar_lea.vmem %s161, 6 [#allocation5]
        %1261 = vst [vmem:[%s1260] ss:$8 sm:$0x1] %v1234
        %1262 = vst [vmem:[%s1260] ss:$8 sm:$0x0] %v1234
        %s1264 = scalar_lea.vmem %s161, 7 [#allocation5]
        %1265 = vst [vmem:[%s1264] ss:$8 sm:$0x1] %v1235
        %1266 = vst [vmem:[%s1264] ss:$8 sm:$0x0] %v1235
        %s1267 = sand.u32 %s74, 1
        %s1268 = scalar_lea.sflag [#allocation4], %s1267
        %s1269 = sand.u32 %s74, 1
        %s1270 = smul.addr %s1269, 8
        %s1271 = scalar_lea.vmem [#allocation5], %s1270
        // Predicated region
        $region33: #{tpu_custom_call.1} parent=27 // pred_check
          %p1272 = pneg %p84
        $region34: #{tpu_custom_call.1} parent=27 // pred_check_branch
          %1274 = sbr.rel (%p1272) target = $region36
        $region35: #{tpu_custom_call.1} parent=27 // pred_region
          %s1276 = ssub.s32 128, 128
          %1277 = vsyncadd %s1268, %s1276
          %s1278 = smul.addr %s19, 128
          %s1279 = scalar_lea.hbm %s2, %s1278
          %s1281 = sshll.u32 %s1271, 4
          %s1282 = int_to_ptr.vmem [resolvable:$true] %s1281
          %1284 = dma.vmem_to_hbm [thread:$0]  %s1282, 128, %s1279, %s1268
        $region36: #{tpu_custom_call.1} parent=27 // pred_fallthru
          _
      $region28: #{tpu_custom_call.1} parent=5 // pred_fallthru
        _
      %p1285 = scmp.le.s32.totalorder 2, %s14
      // Predicated region
      $region37: #{tpu_custom_call.1} parent=5 // pred_check
        %p1286 = pneg %p1285
      $region38: #{tpu_custom_call.1} parent=5 // pred_check_branch
        %1288 = sbr.rel (%p1286) target = $region40
      $region39: #{tpu_custom_call.1} parent=5 // pred_region
        %s1289 = ssub.s32 %s14, 2
        // Predicated region
        $region41: #{tpu_custom_call.1} parent=39 // pred_check
          %p1290 = pneg %p90
        $region42: #{tpu_custom_call.1} parent=39 // pred_check_branch
          %1292 = sbr.rel (%p1290) target = $region44
        $region43: #{tpu_custom_call.1} parent=39 // pred_region
          %s1293 = sand.u32 %s75, 1
          %s1294 = scalar_lea.sflag [#allocation4], %s1293
          %s1295 = sand.u32 %s75, 1
          %s1296 = smul.addr %s1295, 8
          %s1297 = scalar_lea.vmem [#allocation5], %s1296
          %1298 = dma.done %s1294, 128
        $region44: #{tpu_custom_call.1} parent=39 // pred_fallthru
          _
      $region40: #{tpu_custom_call.1} parent=5 // pred_fallthru
        _
    $region6: #{tpu_custom_call.1} parent=1 // loop_footer
      %s18 = sadd.s32 1, %s14
    $region7: #{tpu_custom_call.1} parent=1 // loop_footer_branch
      %13 = sbr.rel target = $region3
    $region8: #{tpu_custom_call.1} parent=1 // loop_exit
      _
    %1299 = vsyncpa [#allocation3], 1
    %s1300 = scalar_lea.sflag [#allocation3], 1
    %1301 = vsyncpa %s1300, 1
    %1302 = vsyncpa [#allocation4], 1
    %s1303 = scalar_lea.sflag [#allocation4], 1
    %1304 = vsyncpa %s1303, 1

</llo_original>
